<compile_context>
chip_gen: v7x
topology: tpu7x:2x2x1
jax: 0.10.0
libtpu: 0.0.40
codegen_flags: <defaults>
</compile_context>

<pallas_src>
import numpy as np
import jax
import jax.numpy as jnp
from jax import lax
from jax.experimental import pallas as pl
from jax.experimental.pallas import tpu as pltpu


# ----------------------------- batch index helper -----------------------------
class BatchIndices:
    """Minimal stand-in for the parser's BatchIndices (static lengths)."""

    def __init__(self, lengths):
        self.lengths = list(lengths)
        self.seq_lens_np = np.asarray(lengths, dtype=np.int32)
        self.batch_size = len(self.lengths)
        self.max_len = max(self.lengths)
        self.boundaries_np = np.cumsum([0] + self.lengths)


def _round_up(x, m):
    return ((x + m - 1) // m) * m


# ------------------------------- fused kernel ----------------------------------
def _make_mle_kernel(v_total, max_len, d_model, eps, n_tables, has_extra, emit_aux):
    def kernel(*refs):
        it = iter(refs)
        idx_ref = next(it)            # [tm, n_tables+1] i32 (table ids already offset)
        tbl_ref = next(it)            # [v_total, d] stacked content tables (resident)
        pos_ref = next(it)            # [max_len, d] position table (resident)
        extra_ref = next(it) if has_extra else None
        a_ref = next(it)              # [1, d]
        b_ref = next(it)              # [1, d]
        ann_ref = next(it)            # [tm, d]
        content_ref = next(it) if emit_aux else None
        timing_ref = next(it) if emit_aux else None

        tm = idx_ref.shape[0]
        ids = idx_ref[...]                                               # one VMEM load

        # ---- content: multi-hot (disjoint offset ranges) @ stacked table ------------
        # Row gather expressed as a single MXU matmul: lane-dense [tm, d] result and
        # exact in f32 (one 1.0 per table region per row).
        iota_v = lax.broadcasted_iota(jnp.int32, (tm, v_total), 1)
        mh = ids[:, 0:1] == iota_v
        for t in range(1, n_tables):
            mh = mh | (ids[:, t:t + 1] == iota_v)
        content = jnp.dot(mh.astype(jnp.float32), tbl_ref[...],
                          preferred_element_type=jnp.float32)            # [tm, d]
        if has_extra:
            # extra_content_annotations (extra_content_dropout = identity in eval)
            content = content + extra_ref[...]

        # ---- timing signal: position_table[pos] (timing_dropout = identity) ---------
        iota_p = lax.broadcasted_iota(jnp.int32, (tm, max_len), 1)
        oh_p = (ids[:, n_tables:n_tables + 1] == iota_p).astype(jnp.float32)
        timing = jnp.dot(oh_p, pos_ref[...], preferred_element_type=jnp.float32)

        # ---- non-partitioned: annotations = LayerNorm(content + timing) -------------
        z = content + timing
        mu = jnp.sum(z, axis=-1, keepdims=True) * (1.0 / d_model)
        zc = z - mu
        # two-pass variance (no cancellation); torch.std is unbiased (N-1)
        var = jnp.sum(zc * zc, axis=-1, keepdims=True) * (1.0 / (d_model - 1))
        sigma = jnp.sqrt(var)
        ann_ref[...] = (zc / (sigma + eps)) * a_ref[...] + b_ref[...]    # eps added to sigma

        if emit_aux:
            content_ref[...] = content
            timing_ref[...] = timing

    return kernel


# ----------------------------- module-level wrapper ----------------------------
class MultiLevelEmbeddingPallas:
    def __init__(self, key, num_embeddings_list, d_embedding, max_len=300, ln_eps=1e-3):
        self.num_embeddings_list = [int(v) for v in num_embeddings_list]
        self.d_embedding = d_embedding
        self.max_len = max_len
        self.ln_eps = ln_eps

        keys = jax.random.split(key, len(num_embeddings_list) + 1)
        # nn.Embedding default init: N(0, 1); use_cat=False -> each table is [vocab, d]
        self.emb_tables = [
            jax.random.normal(k, (v, d_embedding), jnp.float32)
            for k, v in zip(keys[:-1], self.num_embeddings_list)
        ]
        # stacked content table + per-table id offsets (single multi-hot matmul in-kernel)
        self.stacked_table = jnp.concatenate(self.emb_tables, axis=0)
        self.table_offsets = np.cumsum([0] + self.num_embeddings_list)[:-1].astype(np.int32)
        self.v_total = int(sum(self.num_embeddings_list))
        # position_table: init.normal_ -> N(0, 1)
        self.position_table = jax.random.normal(keys[-1], (max_len, d_embedding), jnp.float32)
        # LayerNormalization affine params
        self.a_2 = jnp.ones((1, d_embedding), jnp.float32)
        self.b_2 = jnp.zeros((1, d_embedding), jnp.float32)

        self._call_cache = {}

    # ---------------- tile-size policy (see perf notes in header) ----------------
    @staticmethod
    def _choose_tm(T, tm_max):
        if T < 128:
            return _round_up(max(T, 8), 8)
        tm = min(_round_up(tm_max, 128), _round_up(T, 128))
        # keep >= 2 grid steps when there is enough work (v7x: 2 TensorCores)
        if _round_up(T, tm) // tm < 2 and T >= 256:
            tm = max(128, (tm // 2) // 128 * 128)
        return tm

    # ---------------- build (and cache) a jitted pallas_call variant -------------
    def _get_call(self, Tp, tm, has_extra, emit_aux):
        key = (Tp, tm, has_extra, emit_aux)
        if key in self._call_cache:
            return self._call_cache[key]

        d = self.d_embedding
        n_tables = len(self.emb_tables)
        n_cols = n_tables + 1

        in_specs = [pl.BlockSpec((tm, n_cols), lambda i: (i, 0))]             # packed indices
        in_specs.append(pl.BlockSpec((self.v_total, d), lambda i: (0, 0)))    # stacked table
        in_specs.append(pl.BlockSpec((self.max_len, d), lambda i: (0, 0)))    # position table
        if has_extra:
            in_specs.append(pl.BlockSpec((tm, d), lambda i: (i, 0)))          # extra content
        in_specs.append(pl.BlockSpec((1, d), lambda i: (0, 0)))               # a_2
        in_specs.append(pl.BlockSpec((1, d), lambda i: (0, 0)))               # b_2

        n_out = 3 if emit_aux else 1
        out_specs = tuple(pl.BlockSpec((tm, d), lambda i: (i, 0)) for _ in range(n_out))
        out_shape = tuple(jax.ShapeDtypeStruct((Tp, d), jnp.float32) for _ in range(n_out))
        if not emit_aux:
            out_specs, out_shape = out_specs[0], out_shape[0]

        # explicit scoped-VMEM budget: streamed tiles (double-buffered) + resident tables
        # + one-hot temporaries, with 2x headroom, clamped to a range safe on v5e/v6e/v7x.
        bytes_io = 4 * (tm * n_cols
                        + (tm * d if has_extra else 0)
                        + tm * d * n_out)
        bytes_resident = 4 * (self.v_total * d + self.max_len * d + 2 * d)
        bytes_tmp = 4 * tm * max(self.v_total, self.max_len) + 4 * tm * d * 4
        est = 2 * bytes_io + 2 * bytes_resident + bytes_tmp
        vmem_limit = int(min(max(32 << 20, 2 * est), 64 << 20))

        kernel = _make_mle_kernel(self.v_total, self.max_len, d, self.ln_eps,
                                  n_tables, has_extra, emit_aux)

        call = jax.jit(pl.pallas_call(
            kernel,
            out_shape=out_shape,
            grid=(Tp // tm,),
            in_specs=in_specs,
            out_specs=out_specs,
            compiler_params=pltpu.CompilerParams(
                dimension_semantics=("parallel",),
                vmem_limit_bytes=vmem_limit),
        ))
        self._call_cache[key] = call
        return call

    # ----------------------------------- forward ---------------------------------
    def __call__(self, xs, batch_idxs, extra_content_annotations=None,
                 return_content_and_timing=True, tm_max=512):
        d = self.d_embedding
        n_tables = len(self.emb_tables)
        T = int(batch_idxs.boundaries_np[-1])
        has_extra = extra_content_annotations is not None
        emit_aux = bool(return_content_and_timing)

        # positions within each sentence, wrapped at max_len (exactly the torch while-loop
        # that keeps re-appending position_table[:remaining]).
        pos_idx = np.concatenate(
            [np.arange(int(n)) % self.max_len for n in batch_idxs.seq_lens_np]
        ).astype(np.int32)
        # TODO(synk): this host-side index packing could be cached per BatchIndices or built
        #             on-device; left here since xs arrive as per-table host index vectors.

        cols = [np.asarray(x, np.int32) + off for x, off in zip(xs, self.table_offsets)]
        cols.append(pos_idx)
        idx_np = np.stack(cols, axis=1)                                   # [T, n_tables+1]

        tm = self._choose_tm(T, tm_max)
        Tp = _round_up(T, tm)
        pad = Tp - T
        if pad:
            idx_np = np.concatenate(
                [idx_np, np.zeros((pad, n_tables + 1), np.int32)], axis=0)
        idx = jnp.asarray(idx_np)

        args = [idx, self.stacked_table, self.position_table]
        if has_extra:
            extra = jnp.asarray(extra_content_annotations, jnp.float32)
            if pad:
                extra = jnp.concatenate(
                    [extra, jnp.zeros((pad, d), jnp.float32)], axis=0)
            args.append(extra)
        args += [self.a_2, self.b_2]

        call = self._get_call(Tp, tm, has_extra, emit_aux)
        out = call(*args)

        # strip row padding (dropout on annotations / content is identity in eval)
        if emit_aux:
            ann_p, content_p, timing_p = out
            return ann_p[:T], content_p[:T], timing_p[:T], batch_idxs
        return out[:T], None, None, batch_idxs
        # TODO(synk): use_cat=True / partitioned / pretrained-embedding branches and
        #             training-mode FeatureDropout noise are not implemented.


# ----------------------------------- main --------------------------------------
if __name__ == "__main__":
    key = jax.random.PRNGKey(0)
    k_params, k_x0, k_x1, k_extra = jax.random.split(key, 4)

    num_embeddings_list = [64, 32]   # e.g. tag vocab, word vocab
    d_embedding = 128
    max_len = 32
    lengths = [10, 6]                # two packed sentences -> T = 16
    batch_idxs = BatchIndices(lengths)
    T = sum(lengths)

    xs = [
        jax.random.randint(k_x0, (T,), 0, num_embeddings_list[0], jnp.int32),
        jax.random.randint(k_x1, (T,), 0, num_embeddings_list[1], jnp.int32),
    ]
    extra = 0.1 * jax.random.normal(k_extra, (T, d_embedding), jnp.float32)

    mle = MultiLevelEmbeddingPallas(k_params, num_embeddings_list, d_embedding,
                                    max_len=max_len)

    # full-semantics path: extra provided, content/timing emitted
    annotations, content_annotations, timing_signal, _ = mle(
        xs, batch_idxs, extra_content_annotations=extra)
    jax.block_until_ready((annotations, content_annotations, timing_signal))

    # lean path: no extra-content stream, annotations-only writeback
    ann_lean, c_none, t_none, _ = mle(
        xs, batch_idxs, extra_content_annotations=None,
        return_content_and_timing=False)
    jax.block_until_ready(ann_lean)

    # ----- pure-JAX reference (same eval-mode semantics) -----
    def reference(extra_or_none):
        pos_idx = np.concatenate([np.arange(n) % max_len for n in lengths]).astype(np.int32)
        content = sum(tbl[np.asarray(x)] for tbl, x in zip(mle.emb_tables, xs))
        if extra_or_none is not None:
            content = content + extra_or_none
        timing = mle.position_table[pos_idx]
        z = content + timing
        mu = jnp.mean(z, axis=-1, keepdims=True)
        sigma = jnp.std(z, axis=-1, keepdims=True, ddof=1)   # torch.std (unbiased)
        ann = (z - mu) / (sigma + mle.ln_eps) * mle.a_2 + mle.b_2
        return ann, content, timing

    ann_ref, content_ref, timing_ref = reference(extra)
    ann_ref_lean, _, _ = reference(None)

    assert annotations.shape == (T, d_embedding)
    assert content_annotations.shape == (T, d_embedding)
    assert timing_signal.shape == (T, d_embedding)
    np.testing.assert_allclose(np.asarray(content_annotations),
                               np.asarray(content_ref), rtol=1e-5, atol=1e-5)
    np.testing.assert_allclose(np.asarray(timing_signal),
                               np.asarray(timing_ref), rtol=1e-5, atol=1e-5)
    np.testing.assert_allclose(np.asarray(annotations),
                               np.asarray(ann_ref), rtol=1e-4, atol=1e-4)
    np.testing.assert_allclose(np.asarray(ann_lean),
                               np.asarray(ann_ref_lean), rtol=1e-4, atol=1e-4)
    assert bool(jnp.all(jnp.isfinite(annotations)))
    assert c_none is None and t_none is None
    print("KERNEL_OK")
</pallas_src>

<mosaic_0001>
module attributes {stable_mosaic.version = 11 : i64} {
  func.func @kernel(%arg0: i32, %arg1: memref<16x3xi32, #tpu.memory_space<vmem>>, %arg2: memref<96x128xf32, #tpu.memory_space<vmem>>, %arg3: memref<32x128xf32, #tpu.memory_space<vmem>>, %arg4: memref<16x128xf32, #tpu.memory_space<vmem>>, %arg5: memref<1x128xf32, #tpu.memory_space<vmem>>, %arg6: memref<1x128xf32, #tpu.memory_space<vmem>>, %arg7: memref<16x128xf32, #tpu.memory_space<vmem>>, %arg8: memref<16x128xf32, #tpu.memory_space<vmem>>, %arg9: memref<16x128xf32, #tpu.memory_space<vmem>>) attributes {dimension_semantics = [#tpu.dimension_semantics<parallel>], iteration_bounds = array<i64: 1>, scalar_prefetch = 0 : i64, scratch_operands = 0 : i64, tpu.core_type = #tpu.core_type<tc>, window_params = [{transform_indices = @transform_0, window_bounds = array<i64: 16, 3>}, {pipeline_mode = #tpu.pipeline_mode<synchronous>, transform_indices = @transform_1, window_bounds = array<i64: 96, 128>}, {pipeline_mode = #tpu.pipeline_mode<synchronous>, transform_indices = @transform_2, window_bounds = array<i64: 32, 128>}, {transform_indices = @transform_3, window_bounds = array<i64: 16, 128>}, {pipeline_mode = #tpu.pipeline_mode<synchronous>, transform_indices = @transform_4, window_bounds = array<i64: 1, 128>}, {pipeline_mode = #tpu.pipeline_mode<synchronous>, transform_indices = @transform_5, window_bounds = array<i64: 1, 128>}, {transform_indices = @transform_6, window_bounds = array<i64: 16, 128>}, {transform_indices = @transform_7, window_bounds = array<i64: 16, 128>}, {transform_indices = @transform_8, window_bounds = array<i64: 16, 128>}]} {
    %c0 = arith.constant 0 : index
    %c0_0 = arith.constant 0 : index
    %0 = vector.load %arg1[%c0, %c0_0] : memref<16x3xi32, #tpu.memory_space<vmem>>, vector<16x3xi32>
    %1 = tpu.iota {dimensions = array<i32: 1>} : vector<16x96xi32>
    %2 = vector.extract_strided_slice %0 {offsets = [0, 0], sizes = [16, 1], strides = [1, 1]} : vector<16x3xi32> to vector<16x1xi32>
    %3 = vector.broadcast %2 : vector<16x1xi32> to vector<16x96xi32>
    %4 = arith.cmpi eq, %3, %1 : vector<16x96xi32>
    %5 = vector.extract_strided_slice %0 {offsets = [0, 1], sizes = [16, 1], strides = [1, 1]} : vector<16x3xi32> to vector<16x1xi32>
    %6 = vector.broadcast %5 : vector<16x1xi32> to vector<16x96xi32>
    %7 = arith.cmpi eq, %6, %1 : vector<16x96xi32>
    %8 = arith.ori %4, %7 : vector<16x96xi1>
    %9 = arith.extui %8 : vector<16x96xi1> to vector<16x96xi32>
    %10 = arith.sitofp %9 : vector<16x96xi32> to vector<16x96xf32>
    %c0_1 = arith.constant 0 : index
    %c0_2 = arith.constant 0 : index
    %11 = vector.load %arg2[%c0_1, %c0_2] : memref<96x128xf32, #tpu.memory_space<vmem>>, vector<96x128xf32>
    %cst = arith.constant dense<0.000000e+00> : vector<16x128xf32>
    %12 = tpu.matmul %10, %11, %cst {dimension_numbers = #tpu.dot_dimension_numbers<[1], [0], [0], [1], [0, 0, 1, 1], [], []>} : vector<16x96xf32>, vector<96x128xf32>, vector<16x128xf32> -> vector<16x128xf32>
    %c0_3 = arith.constant 0 : index
    %c0_4 = arith.constant 0 : index
    %13 = vector.load %arg4[%c0_3, %c0_4] : memref<16x128xf32, #tpu.memory_space<vmem>>, vector<16x128xf32>
    %14 = arith.addf %12, %13 : vector<16x128xf32>
    %15 = tpu.iota {dimensions = array<i32: 1>} : vector<16x32xi32>
    %16 = vector.extract_strided_slice %0 {offsets = [0, 2], sizes = [16, 1], strides = [1, 1]} : vector<16x3xi32> to vector<16x1xi32>
    %17 = vector.broadcast %16 : vector<16x1xi32> to vector<16x32xi32>
    %18 = arith.cmpi eq, %17, %15 : vector<16x32xi32>
    %19 = arith.extui %18 : vector<16x32xi1> to vector<16x32xi32>
    %20 = arith.sitofp %19 : vector<16x32xi32> to vector<16x32xf32>
    %c0_5 = arith.constant 0 : index
    %c0_6 = arith.constant 0 : index
    %21 = vector.load %arg3[%c0_5, %c0_6] : memref<32x128xf32, #tpu.memory_space<vmem>>, vector<32x128xf32>
    %cst_7 = arith.constant dense<0.000000e+00> : vector<16x128xf32>
    %22 = tpu.matmul %20, %21, %cst_7 {dimension_numbers = #tpu.dot_dimension_numbers<[1], [0], [0], [1], [0, 0, 1, 1], [], []>} : vector<16x32xf32>, vector<32x128xf32>, vector<16x128xf32> -> vector<16x128xf32>
    %23 = arith.addf %14, %22 : vector<16x128xf32>
    %cst_8 = arith.constant dense<0.000000e+00> : vector<16xf32>
    %24 = vector.multi_reduction <add>, %23, %cst_8 [1] : vector<16x128xf32> to vector<16xf32>
    %25 = vector.shape_cast %24 : vector<16xf32> to vector<16x1xf32>
    %cst_9 = arith.constant 7.812500e-03 : f32
    %26 = vector.broadcast %cst_9 : f32 to vector<16x1xf32>
    %27 = arith.mulf %25, %26 : vector<16x1xf32>
    %28 = vector.broadcast %27 : vector<16x1xf32> to vector<16x128xf32>
    %29 = arith.subf %23, %28 : vector<16x128xf32>
    %30 = arith.mulf %29, %29 : vector<16x128xf32>
    %cst_10 = arith.constant dense<0.000000e+00> : vector<16xf32>
    %31 = vector.multi_reduction <add>, %30, %cst_10 [1] : vector<16x128xf32> to vector<16xf32>
    %32 = vector.shape_cast %31 : vector<16xf32> to vector<16x1xf32>
    %cst_11 = arith.constant 0.00787401571 : f32
    %33 = vector.broadcast %cst_11 : f32 to vector<16x1xf32>
    %34 = arith.mulf %32, %33 : vector<16x1xf32>
    %35 = math.sqrt %34 : vector<16x1xf32>
    %cst_12 = arith.constant 1.000000e-03 : f32
    %36 = vector.broadcast %cst_12 : f32 to vector<16x1xf32>
    %37 = arith.addf %35, %36 : vector<16x1xf32>
    %38 = vector.broadcast %37 : vector<16x1xf32> to vector<16x128xf32>
    %39 = arith.divf %29, %38 : vector<16x128xf32>
    %c0_13 = arith.constant 0 : index
    %c0_14 = arith.constant 0 : index
    %40 = vector.load %arg5[%c0_13, %c0_14] : memref<1x128xf32, #tpu.memory_space<vmem>>, vector<1x128xf32>
    %41 = vector.broadcast %40 : vector<1x128xf32> to vector<16x128xf32>
    %42 = arith.mulf %39, %41 : vector<16x128xf32>
    %c0_15 = arith.constant 0 : index
    %c0_16 = arith.constant 0 : index
    %43 = vector.load %arg6[%c0_15, %c0_16] : memref<1x128xf32, #tpu.memory_space<vmem>>, vector<1x128xf32>
    %44 = vector.broadcast %43 : vector<1x128xf32> to vector<16x128xf32>
    %45 = arith.addf %42, %44 : vector<16x128xf32>
    %c0_17 = arith.constant 0 : index
    %c0_18 = arith.constant 0 : index
    %46 = vector.load %arg7[%c0_17, %c0_18] : memref<16x128xf32, #tpu.memory_space<vmem>>, vector<16x128xf32>
    tpu.vector_store %arg7[%c0_17, %c0_18], %45 {strides = array<i32>} : memref<16x128xf32, #tpu.memory_space<vmem>>, vector<16x128xf32>,
    %c0_19 = arith.constant 0 : index
    %c0_20 = arith.constant 0 : index
    %47 = vector.load %arg8[%c0_19, %c0_20] : memref<16x128xf32, #tpu.memory_space<vmem>>, vector<16x128xf32>
    tpu.vector_store %arg8[%c0_19, %c0_20], %14 {strides = array<i32>} : memref<16x128xf32, #tpu.memory_space<vmem>>, vector<16x128xf32>,
    %c0_21 = arith.constant 0 : index
    %c0_22 = arith.constant 0 : index
    %48 = vector.load %arg9[%c0_21, %c0_22] : memref<16x128xf32, #tpu.memory_space<vmem>>, vector<16x128xf32>
    tpu.vector_store %arg9[%c0_21, %c0_22], %22 {strides = array<i32>} : memref<16x128xf32, #tpu.memory_space<vmem>>, vector<16x128xf32>,
    return
  }
  func.func @transform_0(%arg0: i32) -> (i32, i32) {
    %c0_i32 = arith.constant 0 : i32
    %c0_i32_0 = arith.constant 0 : i32
    return %arg0, %c0_i32 : i32, i32
  }
  func.func @transform_1(%arg0: i32) -> (i32, i32) {
    %c0_i32 = arith.constant 0 : i32
    %c0_i32_0 = arith.constant 0 : i32
    %c0_i32_1 = arith.constant 0 : i32
    return %c0_i32, %c0_i32_0 : i32, i32
  }
  func.func @transform_2(%arg0: i32) -> (i32, i32) {
    %c0_i32 = arith.constant 0 : i32
    %c0_i32_0 = arith.constant 0 : i32
    %c0_i32_1 = arith.constant 0 : i32
    return %c0_i32, %c0_i32_0 : i32, i32
  }
  func.func @transform_3(%arg0: i32) -> (i32, i32) {
    %c0_i32 = arith.constant 0 : i32
    %c0_i32_0 = arith.constant 0 : i32
    return %arg0, %c0_i32 : i32, i32
  }
  func.func @transform_4(%arg0: i32) -> (i32, i32) {
    %c0_i32 = arith.constant 0 : i32
    %c0_i32_0 = arith.constant 0 : i32
    %c0_i32_1 = arith.constant 0 : i32
    return %c0_i32, %c0_i32_0 : i32, i32
  }
  func.func @transform_5(%arg0: i32) -> (i32, i32) {
    %c0_i32 = arith.constant 0 : i32
    %c0_i32_0 = arith.constant 0 : i32
    %c0_i32_1 = arith.constant 0 : i32
    return %c0_i32, %c0_i32_0 : i32, i32
  }
  func.func @transform_6(%arg0: i32) -> (i32, i32) {
    %c0_i32 = arith.constant 0 : i32
    %c0_i32_0 = arith.constant 0 : i32
    return %arg0, %c0_i32 : i32, i32
  }
  func.func @transform_7(%arg0: i32) -> (i32, i32) {
    %c0_i32 = arith.constant 0 : i32
    %c0_i32_0 = arith.constant 0 : i32
    return %arg0, %c0_i32 : i32, i32
  }
  func.func @transform_8(%arg0: i32) -> (i32, i32) {
    %c0_i32 = arith.constant 0 : i32
    %c0_i32_0 = arith.constant 0 : i32
    return %arg0, %c0_i32 : i32, i32
  }
}

</mosaic_0001>

<llo_original>
// kernel: tpu_custom_call.1
$region0: #{tpu_custom_call.1}
  #allocation0 [shape = 'u32[]', space=smem, size = 0x4, offset = 0x4, fixed_abs, tag = 'smem constant byte address 0x4 - core index']
  #allocation1 [shape = 'u32[144,128]{1,0:T(1,128)}', space=vmem, size = 0x12000, scoped, tag = 'internal scratch']
  %s0 = inlined_call_operand.vmem [shape: s32[16,3], index: 0, kind: input, shape index: {}]
  %s1 = inlined_call_operand.hbm [shape: f32[96,128], index: 1, kind: input, shape index: {}]
  %s2 = inlined_call_operand.hbm [shape: f32[32,128], index: 2, kind: input, shape index: {}]
  %s3 = inlined_call_operand.vmem [shape: f32[16,128], index: 3, kind: input, shape index: {}]
  %s4 = inlined_call_operand.vmem [shape: f32[1,128], index: 4, kind: input, shape index: {}]
  %s5 = inlined_call_operand.vmem [shape: f32[1,128], index: 5, kind: input, shape index: {}]
  %s6 = inlined_call_operand.hbm [shape: f32[16,128], index: 6, kind: output, shape index: {0}]
  %s7 = inlined_call_operand.hbm [shape: f32[16,128], index: 7, kind: output, shape index: {1}]
  %s8 = inlined_call_operand.hbm [shape: f32[16,128], index: 8, kind: output, shape index: {2}]
  %9 = xla_tuple %s6, %s7, %s8
  %s10 = sld [smem:[#allocation0]]
  $region58: #{tpu_custom_call.1} parent=0
    _
  %s12 = ssub.s32 1, %s10
  %s13 = scalar_select 0, %s12, %s10
  $region1: #{tpu_custom_call.1} parent=0
    #allocation2 [shape = 'u8[49152]{0}', space=vmem, size = 0xc000, scoped, tag = 'input window, operand 1, single buffered']
    #allocation3 [shape = 's32[1]{0}', space=sflag, size = 0x4, scoped, tag = 'scoped memory for tpu_custom_call.1']
    #allocation4 [shape = 's32[1]{0}', space=sflag, size = 0x4, scoped, tag = 'scoped memory for tpu_custom_call.1']
    #allocation5 [shape = 'u8[16384]{0}', space=vmem, size = 0x4000, scoped, tag = 'input window, operand 2, single buffered']
    #allocation6 [shape = 's32[1]{0}', space=sflag, size = 0x4, scoped, tag = 'scoped memory for tpu_custom_call.1']
    #allocation7 [shape = 'u8[8192]{0}', space=vmem, size = 0x2000, scoped, tag = 'output window, operand 0, single buffered']
    #allocation8 [shape = 'u8[8192]{0}', space=vmem, size = 0x2000, scoped, tag = 'output window, operand 1, single buffered']
    #allocation9 [shape = 's32[1]{0}', space=sflag, size = 0x4, scoped, tag = 'scoped memory for tpu_custom_call.1']
    #allocation10 [shape = 'u8[8192]{0}', space=vmem, size = 0x2000, scoped, tag = 'output window, operand 2, single buffered']
    %14 = vsyncpa [#allocation3], 0
    %15 = vsyncpa [#allocation6], 0
    %16 = vsyncpa [#allocation4], 0
    %17 = vsyncpa [#allocation9], 0
    // Predicated region
    $region2: #{tpu_custom_call.1} parent=1 // pred_check
      _
    $region3: #{tpu_custom_call.1} parent=1 // pred_check_branch
      %19 = sbr.rel (0) target = $region5
    $region4: #{tpu_custom_call.1} parent=1 // pred_region
      _
    $region5: #{tpu_custom_call.1} parent=1 // pred_fallthru
      _
    // Predicated region
    $region6: #{tpu_custom_call.1} parent=1 // pred_check
      _
    $region7: #{tpu_custom_call.1} parent=1 // pred_check_branch
      %21 = sbr.rel (0) target = $region9
    $region8: #{tpu_custom_call.1} parent=1 // pred_region
      %s23 = ssub.s32 1536, 1536
      %24 = vsyncadd [#allocation3], %s23
      %s25 = sshll.u32 [#allocation2], 4
      %s26 = int_to_ptr.vmem [resolvable:$true] %s25
      %31 = dma.hbm_to_vmem [thread:$0]  %s1, 1536, %s26, [#allocation3], 128, 128, 8
    $region9: #{tpu_custom_call.1} parent=1 // pred_fallthru
      _
    // Predicated region
    $region10: #{tpu_custom_call.1} parent=1 // pred_check
      _
    $region11: #{tpu_custom_call.1} parent=1 // pred_check_branch
      %33 = sbr.rel (0) target = $region13
    $region12: #{tpu_custom_call.1} parent=1 // pred_region
      %s35 = ssub.s32 512, 512
      %36 = vsyncadd [#allocation6], %s35
      %s37 = sshll.u32 [#allocation5], 4
      %s38 = int_to_ptr.vmem [resolvable:$true] %s37
      %43 = dma.hbm_to_vmem [thread:$0]  %s2, 512, %s38, [#allocation6], 128, 128, 8
    $region13: #{tpu_custom_call.1} parent=1 // pred_fallthru
      _
    // Predicated region
    $region14: #{tpu_custom_call.1} parent=1 // pred_check
      _
    $region15: #{tpu_custom_call.1} parent=1 // pred_check_branch
      %45 = sbr.rel (0) target = $region17
    $region16: #{tpu_custom_call.1} parent=1 // pred_region
      _
    $region17: #{tpu_custom_call.1} parent=1 // pred_fallthru
      _
    // Predicated region
    $region18: #{tpu_custom_call.1} parent=1 // pred_check
      _
    $region19: #{tpu_custom_call.1} parent=1 // pred_check_branch
      %47 = sbr.rel (0) target = $region21
    $region20: #{tpu_custom_call.1} parent=1 // pred_region
      _
    $region21: #{tpu_custom_call.1} parent=1 // pred_fallthru
      _
    // Predicated region
    $region22: #{tpu_custom_call.1} parent=1 // pred_check
      _
    $region23: #{tpu_custom_call.1} parent=1 // pred_check_branch
      %49 = sbr.rel (0) target = $region25
    $region24: #{tpu_custom_call.1} parent=1 // pred_region
      _
    $region25: #{tpu_custom_call.1} parent=1 // pred_fallthru
      _
    // Predicated region
    $region26: #{tpu_custom_call.1} parent=1 // pred_check
      _
    $region27: #{tpu_custom_call.1} parent=1 // pred_check_branch
      %51 = sbr.rel (0) target = $region29
    $region28: #{tpu_custom_call.1} parent=1 // pred_region
      %52 = dma.done [#allocation3], 1536
    $region29: #{tpu_custom_call.1} parent=1 // pred_fallthru
      _
    // Predicated region
    $region30: #{tpu_custom_call.1} parent=1 // pred_check
      _
    $region31: #{tpu_custom_call.1} parent=1 // pred_check_branch
      %54 = sbr.rel (0) target = $region33
    $region32: #{tpu_custom_call.1} parent=1 // pred_region
      %55 = dma.done [#allocation6], 512
    $region33: #{tpu_custom_call.1} parent=1 // pred_fallthru
      _
    %v56 = vld [vmem:[%s0] sm:$0xff]
    %v57 = vld [vmem:[%s0 + $0x8] sm:$0xff]
    %v58 = vlaneseq
    %v59 = vand.u32 %v58, 127
    %60 = vset.pattern.permute.xlu0 0
    %61 = vperm.xlu0 %60, %v56
    %v62 = vpop.permute.xlu0 %61
    %63 = vset.pattern.permute.xlu0 0
    %64 = vperm.xlu0 %63, %v57
    %v65 = vpop.permute.xlu0 %64
    %vm66 = vcmp.eq.s32.totalorder %v62, %v59
    %vm67 = vcmp.eq.s32.totalorder %v65, %v59
    %68 = vset.pattern.permute.xlu0 1
    %69 = vperm.xlu0 %68, %v56
    %v70 = vpop.permute.xlu0 %69
    %71 = vset.pattern.permute.xlu0 1
    %72 = vperm.xlu0 %71, %v57
    %v73 = vpop.permute.xlu0 %72
    %vm74 = vcmp.eq.s32.totalorder %v70, %v59
    %vm75 = vcmp.eq.s32.totalorder %v73, %v59
    %vm76 = vmor %vm66, %vm74
    %vm77 = vmor %vm67, %vm75
    %v78 = vsel %vm76, 1, 0
    %v79 = vsel %vm77, 1, 0
    %v80 = vcvt.s32.f32 %v78
    %v81 = vcvt.s32.f32 %v79
    %v82 = vld [vmem:[#allocation2] sm:$0xff]
    %v83 = vld [vmem:[#allocation2 + $0x8] sm:$0xff]
    %v84 = vld [vmem:[#allocation2 + $0x10] sm:$0xff]
    %v85 = vld [vmem:[#allocation2 + $0x18] sm:$0xff]
    %v86 = vld [vmem:[#allocation2 + $0x20] sm:$0xff]
    %v87 = vld [vmem:[#allocation2 + $0x28] sm:$0xff]
    %v88 = vld [vmem:[#allocation2 + $0x30] sm:$0xff]
    %v89 = vld [vmem:[#allocation2 + $0x38] sm:$0xff]
    %v90 = vld [vmem:[#allocation2 + $0x40] sm:$0xff]
    %v91 = vld [vmem:[#allocation2 + $0x48] sm:$0xff]
    %v92 = vld [vmem:[#allocation2 + $0x50] sm:$0xff]
    %v93 = vld [vmem:[#allocation2 + $0x58] sm:$0xff]
    %v94 = vld [vmem:[%s3] sm:$0xff]
    %v95 = vld [vmem:[%s3 + $0x8] sm:$0xff]
    %vm96 = vcmask 785408
    %v98 = vsel %vm96, %v80, 0
    %v101 = vsel %vm96, %v81, 0
    %103 = vmatprep.subr.mxu0 0.0
    %104 = vmatpush1.msra.mxu0 %v82
    %105 = vmatprep.subr.mxu0 0.0
    %106 = vmatpush1.msra.mxu0 %v83
    %107 = vmatprep.subr.mxu0 0.0
    %108 = vmatpush1.msra.mxu0 %v84
    %109 = vmatprep.subr.mxu0 0.0
    %110 = vmatpush1.msra.mxu0 %v85
    %111 = vmatprep.subr.mxu0 0.0
    %112 = vmatpush1.msra.mxu0 %v86
    %113 = vmatprep.subr.mxu0 0.0
    %114 = vmatpush1.msra.mxu0 %v87
    %115 = vmatprep.subr.mxu0 0.0
    %116 = vmatpush1.msra.mxu0 %v88
    %117 = vmatprep.subr.mxu0 0.0
    %118 = vmatpush1.msra.mxu0 %v89
    %119 = vmatprep.subr.mxu0 0.0
    %120 = vmatpush1.msra.mxu0 %v90
    %121 = vmatprep.subr.mxu0 0.0
    %122 = vmatpush1.msra.mxu0 %v91
    %123 = vmatprep.subr.mxu0 0.0
    %124 = vmatpush1.msra.mxu0 %v92
    %125 = vmatprep.subr.mxu0 0.0
    %126 = vmatpush1.msra.mxu0 %v93
    %127 = vmatprep.subr.mxu0 0.0
    %128 = vmatpush1.msra.mxu0 0.0
    %129 = vmatprep.subr.mxu0 0.0
    %130 = vmatpush1.msra.mxu0 0.0
    %131 = vmatprep.subr.mxu0 0.0
    %132 = vmatpush1.msra.mxu0 0.0
    %133 = vmatprep.subr.mxu0 0.0
    %134 = vmatpush1.msra.mxu0 0.0
    %135 = vmatprep.subr.mxu0 0.0
    %136 = vmatpush1.msra.mxu0 0.0
    %137 = vmatprep.subr.mxu0 0.0
    %138 = vmatpush1.msra.mxu0 0.0
    %139 = vmatprep.subr.mxu0 0.0
    %140 = vmatpush1.msra.mxu0 0.0
    %141 = vmatprep.subr.mxu0 0.0
    %142 = vmatpush1.msra.mxu0 0.0
    %143 = vmatprep.subr.mxu0 0.0
    %144 = vmatpush1.msra.mxu0 0.0
    %145 = vmatprep.subr.mxu0 0.0
    %146 = vmatpush1.msra.mxu0 0.0
    %147 = vmatprep.subr.mxu0 0.0
    %148 = vmatpush1.msra.mxu0 0.0
    %149 = vmatprep.subr.mxu0 0.0
    %150 = vmatpush1.msra.mxu0 0.0
    %151 = vmatprep.subr.mxu0 0.0
    %152 = vmatpush1.msra.mxu0 0.0
    %153 = vmatprep.subr.mxu0 0.0
    %154 = vmatpush1.msra.mxu0 0.0
    %155 = vmatprep.subr.mxu0 0.0
    %156 = vmatpush1.msra.mxu0 0.0
    %157 = vmatprep.subr.mxu0 0.0
    %158 = vmatpush1.msra.mxu0 0.0
    %159 = vmatprep.subr.mxu0 0.0
    %160 = vmatpush1.msra.mxu0 0.0
    %161 = vmatprep.subr.mxu0 0.0
    %162 = vmatpush1.msra.mxu0 0.0
    %163 = vmatprep.subr.mxu0 0.0
    %164 = vmatpush1.msra.mxu0 0.0
    %165 = vmatprep.subr.mxu0 0.0
    %166 = vmatpush1.msra.mxu0 0.0
    %167 = vmatprep.mubr.f32.mxu0 0.0
    %168 = vmatmul.mubr.f32.gmra.mrb[0].mxu0 %v98
    %v169 = vpop.f32.mrb[0].mxu0
    %v170 = vadd.f32 %v94, %v169
    %v171 = vpop.f32.mrb[0].mxu0
    %172 = vmatprep.mubr.f32.mxu0 0.0
    %173 = vmatmul.mubr.f32.gmra.mrb[0].mxu0 %v101
    %v174 = vpop.f32.mrb[0].mxu0
    %v175 = vadd.f32 %v95, %v174
    %v176 = vpop.f32.mrb[0].mxu0
    %177 = vdwg.mxu0
    %178 = vset.pattern.permute.xlu0 2
    %179 = vperm.xlu0 %178, %v56
    %v180 = vpop.permute.xlu0 %179
    %181 = vset.pattern.permute.xlu0 2
    %182 = vperm.xlu0 %181, %v57
    %v183 = vpop.permute.xlu0 %182
    %vm184 = vcmp.eq.s32.totalorder %v180, %v59
    %vm185 = vcmp.eq.s32.totalorder %v183, %v59
    %v186 = vsel %vm184, 1, 0
    %v187 = vsel %vm185, 1, 0
    %v188 = vcvt.s32.f32 %v186
    %v189 = vcvt.s32.f32 %v187
    %v190 = vld [vmem:[#allocation5] sm:$0xff]
    %v191 = vld [vmem:[#allocation5 + $0x8] sm:$0xff]
    %v192 = vld [vmem:[#allocation5 + $0x10] sm:$0xff]
    %v193 = vld [vmem:[#allocation5 + $0x18] sm:$0xff]
    %vm194 = vcmask 261120
    %v196 = vsel %vm194, %v188, 0
    %v199 = vsel %vm194, %v189, 0
    %201 = vmatprep.subr.mxu0 0.0
    %202 = vmatpush1.msra.mxu0 %v190
    %203 = vmatprep.subr.mxu0 0.0
    %204 = vmatpush1.msra.mxu0 %v191
    %205 = vmatprep.subr.mxu0 0.0
    %206 = vmatpush1.msra.mxu0 %v192
    %207 = vmatprep.subr.mxu0 0.0
    %208 = vmatpush1.msra.mxu0 %v193
    %209 = vmatprep.subr.mxu0 0.0
    %210 = vmatpush1.msra.mxu0 0.0
    %211 = vmatprep.subr.mxu0 0.0
    %212 = vmatpush1.msra.mxu0 0.0
    %213 = vmatprep.subr.mxu0 0.0
    %214 = vmatpush1.msra.mxu0 0.0
    %215 = vmatprep.subr.mxu0 0.0
    %216 = vmatpush1.msra.mxu0 0.0
    %217 = vmatprep.subr.mxu0 0.0
    %218 = vmatpush1.msra.mxu0 0.0
    %219 = vmatprep.subr.mxu0 0.0
    %220 = vmatpush1.msra.mxu0 0.0
    %221 = vmatprep.subr.mxu0 0.0
    %222 = vmatpush1.msra.mxu0 0.0
    %223 = vmatprep.subr.mxu0 0.0
    %224 = vmatpush1.msra.mxu0 0.0
    %225 = vmatprep.subr.mxu0 0.0
    %226 = vmatpush1.msra.mxu0 0.0
    %227 = vmatprep.subr.mxu0 0.0
    %228 = vmatpush1.msra.mxu0 0.0
    %229 = vmatprep.subr.mxu0 0.0
    %230 = vmatpush1.msra.mxu0 0.0
    %231 = vmatprep.subr.mxu0 0.0
    %232 = vmatpush1.msra.mxu0 0.0
    %233 = vmatprep.subr.mxu0 0.0
    %234 = vmatpush1.msra.mxu0 0.0
    %235 = vmatprep.subr.mxu0 0.0
    %236 = vmatpush1.msra.mxu0 0.0
    %237 = vmatprep.subr.mxu0 0.0
    %238 = vmatpush1.msra.mxu0 0.0
    %239 = vmatprep.subr.mxu0 0.0
    %240 = vmatpush1.msra.mxu0 0.0
    %241 = vmatprep.subr.mxu0 0.0
    %242 = vmatpush1.msra.mxu0 0.0
    %243 = vmatprep.subr.mxu0 0.0
    %244 = vmatpush1.msra.mxu0 0.0
    %245 = vmatprep.subr.mxu0 0.0
    %246 = vmatpush1.msra.mxu0 0.0
    %247 = vmatprep.subr.mxu0 0.0
    %248 = vmatpush1.msra.mxu0 0.0
    %249 = vmatprep.subr.mxu0 0.0
    %250 = vmatpush1.msra.mxu0 0.0
    %251 = vmatprep.subr.mxu0 0.0
    %252 = vmatpush1.msra.mxu0 0.0
    %253 = vmatprep.subr.mxu0 0.0
    %254 = vmatpush1.msra.mxu0 0.0
    %255 = vmatprep.subr.mxu0 0.0
    %256 = vmatpush1.msra.mxu0 0.0
    %257 = vmatprep.subr.mxu0 0.0
    %258 = vmatpush1.msra.mxu0 0.0
    %259 = vmatprep.subr.mxu0 0.0
    %260 = vmatpush1.msra.mxu0 0.0
    %261 = vmatprep.subr.mxu0 0.0
    %262 = vmatpush1.msra.mxu0 0.0
    %263 = vmatprep.subr.mxu0 0.0
    %264 = vmatpush1.msra.mxu0 0.0
    %265 = vmatprep.mubr.f32.mxu0 0.0
    %266 = vmatmul.mubr.f32.gmra.mrb[0].mxu0 %v196
    %v267 = vpop.f32.mrb[0].mxu0
    %v268 = vadd.f32 0.0, %v267
    %v269 = vpop.f32.mrb[0].mxu0
    %270 = vmatprep.mubr.f32.mxu0 0.0
    %271 = vmatmul.mubr.f32.gmra.mrb[0].mxu0 %v199
    %v272 = vpop.f32.mrb[0].mxu0
    %v273 = vadd.f32 0.0, %v272
    %v274 = vpop.f32.mrb[0].mxu0
    %275 = vdwg.mxu0
    %v276 = vadd.f32 %v170, %v268
    %v277 = vadd.f32 %v175, %v273
    %278 = vadd.xlane.f32.xlu0 %v276
    %v279 = vpop.xlane.xlu0 %278
    %280 = vadd.xlane.f32.xlu0 %v277
    %v281 = vpop.xlane.xlu0 %280
    %v282 = vmul.f32 %v279, 0.0078125
    %v283 = vmul.f32 %v281, 0.0078125
    %v284 = vsub.f32 %v276, %v282
    %v285 = vsub.f32 %v277, %v283
    %v286 = vmul.f32 %v284, %v284
    %v287 = vmul.f32 %v285, %v285
    %288 = vadd.xlane.f32.xlu0 %v286
    %v289 = vpop.xlane.xlu0 %288
    %290 = vadd.xlane.f32.xlu0 %v287
    %v291 = vpop.xlane.xlu0 %290
    %v292 = vmul.f32 %v289, 0.007874016
    %v293 = vmul.f32 %v291, 0.007874016
    %v294 = vrsqrt.pop %v292
    %v295 = vmul.f32 %v292, %v294
    %vm296 = vcmp.eq.f32.partialorder %v292, inf
    %v297 = vsel %vm296, %v292, %v295
    %vm298 = vcmp.eq.f32.partialorder %v292, 0.0
    %v299 = vand.u32 %v292, 2147483648
    %v300 = vsel %vm298, %v299, %v297
    %v301 = vrsqrt.pop %v293
    %v302 = vmul.f32 %v293, %v301
    %vm303 = vcmp.eq.f32.partialorder %v293, inf
    %v304 = vsel %vm303, %v293, %v302
    %vm305 = vcmp.eq.f32.partialorder %v293, 0.0
    %v306 = vand.u32 %v293, 2147483648
    %v307 = vsel %vm305, %v306, %v304
    %v308 = vadd.f32 %v300, 0.001
    %v309 = vadd.f32 %v307, 0.001
    %v310 = vrcp.pop %v308
    %v311 = vmul.f32 %v284, %v310
    %v312 = vrcp.pop %v309
    %v313 = vmul.f32 %v285, %v312
    %v314 = vld [vmem:[%s4] sm:$0x1]
    %v316 = vlaneseq
    %v317 = vshrl.u32 %v316, 7
    %v318 = vsub.s32 0, %v317
    %v319 = vrot.slane %v314, %v318
    %v321 = vmul.f32 %v311, %v319
    %v322 = vmul.f32 %v313, %v319
    %v323 = vld [vmem:[%s5] sm:$0x1]
    %v325 = vlaneseq
    %v326 = vshrl.u32 %v325, 7
    %v327 = vsub.s32 0, %v326
    %v328 = vrot.slane %v323, %v327
    %v330 = vadd.f32 %v321, %v328
    %v331 = vadd.f32 %v322, %v328
    %332 = vst [vmem:[#allocation7] sm:$0xff] %v330
    %333 = vst [vmem:[#allocation7 + $0x8] sm:$0xff] %v331
    %334 = vst [vmem:[#allocation8] sm:$0xff] %v170
    %335 = vst [vmem:[#allocation8 + $0x8] sm:$0xff] %v175
    %336 = vst [vmem:[#allocation10] sm:$0xff] %v268
    %337 = vst [vmem:[#allocation10 + $0x8] sm:$0xff] %v273
    // Predicated region
    $region34: #{tpu_custom_call.1} parent=1 // pred_check
      _
    $region35: #{tpu_custom_call.1} parent=1 // pred_check_branch
      %339 = sbr.rel (0) target = $region37
    $region36: #{tpu_custom_call.1} parent=1 // pred_region
      %s341 = ssub.s32 256, 256
      %342 = vsyncadd [#allocation4], %s341
      %s343 = sshll.u32 [#allocation7], 4
      %s344 = int_to_ptr.vmem [resolvable:$true] %s343
      %349 = dma.vmem_to_hbm [thread:$0]  %s344, 256, %s6, [#allocation4], 128, 128, 8
    $region37: #{tpu_custom_call.1} parent=1 // pred_fallthru
      _
    // Predicated region
    $region38: #{tpu_custom_call.1} parent=1 // pred_check
      _
    $region39: #{tpu_custom_call.1} parent=1 // pred_check_branch
      %351 = sbr.rel (0) target = $region41
    $region40: #{tpu_custom_call.1} parent=1 // pred_region
      %s353 = ssub.s32 256, 256
      %354 = vsyncadd [#allocation9], %s353
      %s355 = sshll.u32 [#allocation8], 4
      %s356 = int_to_ptr.vmem [resolvable:$true] %s355
      %361 = dma.vmem_to_hbm [thread:$0]  %s356, 256, %s7, [#allocation9], 128, 128, 8
    $region41: #{tpu_custom_call.1} parent=1 // pred_fallthru
      _
    // Predicated region
    $region42: #{tpu_custom_call.1} parent=1 // pred_check
      _
    $region43: #{tpu_custom_call.1} parent=1 // pred_check_branch
      %363 = sbr.rel (0) target = $region45
    $region44: #{tpu_custom_call.1} parent=1 // pred_region
      %s365 = ssub.s32 256, 256
      %366 = vsyncadd [#allocation9], %s365
      %s367 = sshll.u32 [#allocation10], 4
      %s368 = int_to_ptr.vmem [resolvable:$true] %s367
      %373 = dma.vmem_to_hbm [thread:$0]  %s368, 256, %s8, [#allocation9], 128, 128, 8
    $region45: #{tpu_custom_call.1} parent=1 // pred_fallthru
      _
    // Predicated region
    $region46: #{tpu_custom_call.1} parent=1 // pred_check
      _
    $region47: #{tpu_custom_call.1} parent=1 // pred_check_branch
      %375 = sbr.rel (0) target = $region49
    $region48: #{tpu_custom_call.1} parent=1 // pred_region
      %376 = dma.done [#allocation4], 256
    $region49: #{tpu_custom_call.1} parent=1 // pred_fallthru
      _
    // Predicated region
    $region50: #{tpu_custom_call.1} parent=1 // pred_check
      _
    $region51: #{tpu_custom_call.1} parent=1 // pred_check_branch
      %378 = sbr.rel (0) target = $region53
    $region52: #{tpu_custom_call.1} parent=1 // pred_region
      %379 = dma.done [#allocation9], 256
    $region53: #{tpu_custom_call.1} parent=1 // pred_fallthru
      _
    // Predicated region
    $region54: #{tpu_custom_call.1} parent=1 // pred_check
      _
    $region55: #{tpu_custom_call.1} parent=1 // pred_check_branch
      %381 = sbr.rel (0) target = $region57
    $region56: #{tpu_custom_call.1} parent=1 // pred_region
      %382 = dma.done [#allocation9], 256
    $region57: #{tpu_custom_call.1} parent=1 // pred_fallthru
      _
    %383 = vsyncpa [#allocation3], 1
    %384 = vsyncpa [#allocation6], 1
    %385 = vsyncpa [#allocation4], 1
    %386 = vsyncpa [#allocation9], 1

</llo_original>
